<compile_context>
chip_gen: v6e
topology: v6e:2x2x1
jax: 0.10.0
libtpu: 0.0.40
codegen_flags: <defaults>
</compile_context>

<pallas_src>
import functools

import jax
import jax.numpy as jnp
from jax import lax
from jax.experimental import pallas as pl
from jax.experimental.pallas import tpu as pltpu


# --------------------------------------------------------------------------
# Fused kernel: NestedSampler mask + embed_cond (gate + Linear) for TB samples.
# --------------------------------------------------------------------------
def _embed_cond_kernel(b_ref, slots_ref, null_ref, w_ref, bias_ref, out_ref,
                       *, num_slots: int):
    """b_ref:     [TB, 1] int32 per-sample slot counts (clamped in-kernel).
    slots_ref: [TB, K, D] slots of the current batch tile.
    null_ref:  [K, D]  learned null condition (grid-invariant).
    w_ref:     [D, H]  autoenc_cond_embedder weight (grid-invariant).
    bias_ref:  [1, H]  autoenc_cond_embedder bias (grid-invariant).
    out_ref:   [TB, K, H] embedded (masked) condition for the tile."""
    slots = slots_ref[...]                                        # [TB, K, D]
    tb, k, d = slots.shape
    # NestedSampler: b = clamp(b, max=num_slots); mask = arange[None,:] < b
    b = jnp.minimum(b_ref[...], num_slots)                        # [TB, 1]
    slot_ids = lax.broadcasted_iota(jnp.int32, slots.shape, 1)    # slot idx (K axis)
    keep = slot_ids < b[:, :, None]                               # [TB, K, D] bool
    # embed_cond: where(drop_mask, slots, null_cond) then Linear(D -> H)
    cond = jnp.where(keep, slots, null_ref[...][None])            # [TB, K, D]
    # One MXU matmul per grid step with M = TB*K rows.
    acc = jnp.dot(cond.reshape(tb * k, d), w_ref[...],
                  preferred_element_type=jnp.float32)             # [TB*K, H] f32
    acc = acc.reshape(tb, k, -1) + bias_ref[...]                  # [TB, K, H]
    out_ref[...] = acc.astype(out_ref.dtype)


def embed_cond_nested(slots, null_cond, w, bias, b_counts, *, tile_b=32):
    """Fused NestedSampler mask + DiT_with_autoenc_cond.embed_cond.

    slots:     [B, K, D] autoencoder slots (autoenc_cond)
    null_cond: [1, K, D] learned null condition
    w:         [D, H] embedder weight, bias: [H]
    b_counts:  [B] int   per-sample slot count (sampled / constant)
    returns    [B, K, H]
    """
    B, K, D = slots.shape
    H = w.shape[1]
    out_dtype = slots.dtype

    # Batch tile: TB samples per grid step => TB*K matmul rows per step.
    # tile_b=32 with K=8 gives M=256 (fills v6e/v7x MXU; >=128 covers v5e).
    TB = min(tile_b, B)
    Bp = pl.cdiv(B, TB) * TB
    b_i32 = b_counts.astype(jnp.int32)
    if Bp != B:
        # Pad the batch; padded rows get b=0 -> all-null cond, sliced off below.
        slots_p = jnp.pad(slots, ((0, Bp - B), (0, 0), (0, 0)))
        b_p = jnp.pad(b_i32, (0, Bp - B))
    else:
        slots_p, b_p = slots, b_i32
    b2 = b_p.reshape(Bp, 1)
    null2 = null_cond.reshape(K, D)
    bias2 = bias.reshape(1, H)

    itemsize = jnp.dtype(out_dtype).itemsize
    cost = pl.CostEstimate(
        flops=2 * Bp * K * D * H,
        transcendentals=0,
        bytes_accessed=(Bp * K * D + K * D + D * H + H + Bp * K * H) * itemsize
        + Bp * 4,
    )

    grid_spec = pltpu.PrefetchScalarGridSpec(
        num_scalar_prefetch=0,
        grid=(Bp // TB,),
        in_specs=[
            pl.BlockSpec((TB, 1), lambda i: (i, 0)),        # per-sample counts
            pl.BlockSpec((TB, K, D), lambda i: (i, 0, 0)),  # slots tile
            pl.BlockSpec((K, D), lambda i: (0, 0)),         # null_cond (resident)
            pl.BlockSpec((D, H), lambda i: (0, 0)),         # embedder weight
            pl.BlockSpec((1, H), lambda i: (0, 0)),         # embedder bias
        ],
        out_specs=pl.BlockSpec((TB, K, H), lambda i: (i, 0, 0)),
    )
    out = pl.pallas_call(
        functools.partial(_embed_cond_kernel, num_slots=K),
        grid_spec=grid_spec,
        out_shape=jax.ShapeDtypeStruct((Bp, K, H), out_dtype),
        compiler_params=pltpu.CompilerParams(
            dimension_semantics=("parallel",)),
        cost_estimate=cost,
    )(b2, slots_p, null2, w, bias2)
    return out[:B] if Bp != B else out


def embed_cond(slots, null_cond, w, bias, b_counts=None, *, tile_b=32):
    """embed_cond dispatch.  b_counts=None is the eval path (no mask at all):
    skip the kernel and let XLA fuse the plain Linear into the DiT graph."""
    if b_counts is None:
        return jnp.einsum("bkd,dh->bkh", slots, w) + bias
    return embed_cond_nested(slots, null_cond, w, bias, b_counts, tile_b=tile_b)


# --------------------------------------------------------------------------
# NestedSampler.forward -- constant-b paths are static, no kernel launch.
# --------------------------------------------------------------------------
def nested_sampler_counts(batch_size, num_slots, *, training=False,
                          inference_with_n_slots=-1, key=None):
    """Per-sample slot counts `b` (NestedSampler.sample / full / fixed)."""
    if training:
        assert key is not None, "training mode needs a PRNG key"
        return jax.random.randint(key, (batch_size,), 1, num_slots + 1,
                                  dtype=jnp.int32)
    if inference_with_n_slots != -1:
        return jnp.full((batch_size,), min(inference_with_n_slots, num_slots),
                        dtype=jnp.int32)
    return jnp.full((batch_size,), num_slots, dtype=jnp.int32)


def nested_sampler_slot_mask(batch_size, num_slots, *, training=False,
                             inference_with_n_slots=-1, key=None):
    """Standalone NestedSampler.forward (bool mask). Constant-b paths return a
    compile-time constant; training mask is a trivial XLA compare. When the
    mask feeds embed_cond, use embed_cond_nested instead (mask is fused)."""
    if training:
        assert key is not None, "training mode needs a PRNG key"
        b = jax.random.randint(key, (batch_size,), 1, num_slots + 1,
                               dtype=jnp.int32)
        b = jnp.minimum(b, num_slots)
        return jnp.arange(num_slots)[None, :] < b[:, None]
    if inference_with_n_slots != -1:
        n = min(inference_with_n_slots, num_slots)
        return jnp.broadcast_to(jnp.arange(num_slots) < n,
                                (batch_size, num_slots))
    return jnp.ones((batch_size, num_slots), dtype=jnp.bool_)


def cond_drop_counts(key, batch_size, num_slots, drop_prob=0.1):
    """embed_cond training path with drop_mask=None (whole-sample CFG dropout),
    expressed as slot counts so it reuses the same fused kernel:
    dropped sample -> b=0 -> all-null cond; kept sample -> b=num_slots."""
    drop = jax.random.uniform(key, (batch_size,)) < drop_prob
    return jnp.where(drop, 0, num_slots).astype(jnp.int32)


# TODO(synk): the rest of DiffuseSlot (VAE encode/decode, DiT backbone, diffusion
# sampling loop, vision encoder) is a full model stack, out of scope here.

if __name__ == "__main__":
    key = jax.random.PRNGKey(0)
    k_slots, k_null, k_w, k_bias, k_b, k_big, k_bb, k_drop = jax.random.split(key, 8)

    batch_size = 2
    num_slots = 8     # K (num_autoenc slots)
    slot_dim = 32     # D (autoenc_dim)
    hidden = 128      # DiT hidden_size (lane-dense output, multiple of 128)

    slots = jax.random.normal(k_slots, (batch_size, num_slots, slot_dim),
                              jnp.float32)
    null_cond = 0.02 * jax.random.normal(k_null, (1, num_slots, slot_dim),
                                         jnp.float32)
    w = 0.02 * jax.random.normal(k_w, (slot_dim, hidden), jnp.float32)
    bias = 0.02 * jax.random.normal(k_bias, (hidden,), jnp.float32)

    def ref_embed(slots_, counts_):
        mask_ = (jnp.arange(num_slots)[None, :]
                 < jnp.minimum(counts_, num_slots)[:, None])
        cond_ = jnp.where(mask_[:, :, None], slots_, null_cond)
        return jnp.einsum("bkd,dh->bkh", cond_, w) + bias

    # --- NestedSampler constant-b paths: pure constants, no kernel launch.
    mask_eval = nested_sampler_slot_mask(batch_size, num_slots)
    assert mask_eval.shape == (batch_size, num_slots)
    assert bool(jnp.all(mask_eval))
    mask_inf = nested_sampler_slot_mask(batch_size, num_slots,
                                        inference_with_n_slots=3)
    ref_mask = jnp.broadcast_to(jnp.arange(num_slots) < 3,
                                (batch_size, num_slots))
    assert bool(jnp.array_equal(mask_inf, ref_mask))

    # --- Training path: random per-sample slot counts, mask fused into the
    #     embed_cond kernel (no bool mask ever hits HBM).
    b_train = nested_sampler_counts(batch_size, num_slots, training=True,
                                    key=k_b)
    out = jax.block_until_ready(
        embed_cond_nested(slots, null_cond, w, bias, b_train))
    assert out.shape == (batch_size, num_slots, hidden)
    assert bool(jnp.allclose(out, ref_embed(slots, b_train),
                             rtol=1e-3, atol=1e-3))

    # --- Inference with a fixed number of slots through the same fused kernel.
    b_inf = nested_sampler_counts(batch_size, num_slots,
                                  inference_with_n_slots=3)
    out_inf = jax.block_until_ready(
        embed_cond_nested(slots, null_cond, w, bias, b_inf))
    assert bool(jnp.allclose(out_inf, ref_embed(slots, b_inf),
                             rtol=1e-3, atol=1e-3))

    # --- Eval path (no mask): skips the kernel, plain XLA einsum.
    out_eval = jax.block_until_ready(embed_cond(slots, null_cond, w, bias, None))
    ref_eval = jnp.einsum("bkd,dh->bkh", slots, w) + bias
    assert bool(jnp.allclose(out_eval, ref_eval, rtol=1e-3, atol=1e-3))

    # --- Larger batch exercising the batch-tiled grid + partial-tile padding
    #     (B=40, TB=32 -> grid of 2 steps, 24 padded rows sliced off) and the
    #     CFG whole-sample dropout path mapped onto the same kernel.
    B_big = 40
    slots_big = jax.random.normal(k_big, (B_big, num_slots, slot_dim),
                                  jnp.float32)
    b_big = nested_sampler_counts(B_big, num_slots, training=True, key=k_bb)
    out_big = jax.block_until_ready(
        embed_cond_nested(slots_big, null_cond, w, bias, b_big))
    ref_big = jnp.einsum(
        "bkd,dh->bkh",
        jnp.where((jnp.arange(num_slots)[None, :]
                   < jnp.minimum(b_big, num_slots)[:, None])[:, :, None],
                  slots_big, null_cond), w) + bias
    assert out_big.shape == (B_big, num_slots, hidden)
    assert bool(jnp.allclose(out_big, ref_big, rtol=1e-3, atol=1e-3))

    b_cfg = cond_drop_counts(k_drop, B_big, num_slots, drop_prob=0.5)
    out_cfg = jax.block_until_ready(
        embed_cond_nested(slots_big, null_cond, w, bias, b_cfg))
    ref_cfg = jnp.einsum(
        "bkd,dh->bkh",
        jnp.where((b_cfg > 0)[:, None, None], slots_big, null_cond), w) + bias
    assert bool(jnp.allclose(out_cfg, ref_cfg, rtol=1e-3, atol=1e-3))

    print("KERNEL_OK")
</pallas_src>

<mosaic_0001>
module attributes {stable_mosaic.version = 11 : i64} {
  func.func @_embed_cond_kernel(%arg0: i32, %arg1: memref<2x1xi32, #tpu.memory_space<vmem>>, %arg2: memref<2x8x32xf32, #tpu.memory_space<vmem>>, %arg3: memref<8x32xf32, #tpu.memory_space<vmem>>, %arg4: memref<32x128xf32, #tpu.memory_space<vmem>>, %arg5: memref<1x128xf32, #tpu.memory_space<vmem>>, %arg6: memref<2x8x128xf32, #tpu.memory_space<vmem>>) attributes {dimension_semantics = [#tpu.dimension_semantics<parallel>], iteration_bounds = array<i64: 1>, scalar_prefetch = 0 : i64, scratch_operands = 0 : i64, tpu.core_type = #tpu.core_type<tc>, window_params = [{transform_indices = @transform_0, window_bounds = array<i64: 2, 1>}, {transform_indices = @transform_1, window_bounds = array<i64: 2, 8, 32>}, {pipeline_mode = #tpu.pipeline_mode<synchronous>, transform_indices = @transform_2, window_bounds = array<i64: 8, 32>}, {pipeline_mode = #tpu.pipeline_mode<synchronous>, transform_indices = @transform_3, window_bounds = array<i64: 32, 128>}, {pipeline_mode = #tpu.pipeline_mode<synchronous>, transform_indices = @transform_4, window_bounds = array<i64: 1, 128>}, {transform_indices = @transform_5, window_bounds = array<i64: 2, 8, 128>}]} {
    %c0 = arith.constant 0 : index
    %c0_0 = arith.constant 0 : index
    %c0_1 = arith.constant 0 : index
    %0 = vector.load %arg2[%c0, %c0_0, %c0_1] : memref<2x8x32xf32, #tpu.memory_space<vmem>>, vector<2x8x32xf32>
    %c0_2 = arith.constant 0 : index
    %c0_3 = arith.constant 0 : index
    %1 = vector.load %arg1[%c0_2, %c0_3] : memref<2x1xi32, #tpu.memory_space<vmem>>, vector<2x1xi32>
    %c8_i32 = arith.constant 8 : i32
    %2 = vector.broadcast %c8_i32 : i32 to vector<2x1xi32>
    %3 = arith.minsi %1, %2 : vector<2x1xi32>
    %4 = tpu.iota {dimensions = array<i32: 1>} : vector<2x8x32xi32>
    %5 = vector.shape_cast %3 : vector<2x1xi32> to vector<2x1x1xi32>
    %6 = vector.broadcast %5 : vector<2x1x1xi32> to vector<2x8x32xi32>
    %7 = arith.cmpi slt, %4, %6 : vector<2x8x32xi32>
    %c0_4 = arith.constant 0 : index
    %c0_5 = arith.constant 0 : index
    %8 = vector.load %arg3[%c0_4, %c0_5] : memref<8x32xf32, #tpu.memory_space<vmem>>, vector<8x32xf32>
    %9 = vector.shape_cast %8 : vector<8x32xf32> to vector<1x8x32xf32>
    %10 = vector.shape_cast %9 : vector<1x8x32xf32> to vector<1x8x32xf32>
    %11 = vector.broadcast %10 : vector<1x8x32xf32> to vector<2x8x32xf32>
    %12 = arith.select %7, %0, %11 : vector<2x8x32xi1>, vector<2x8x32xf32>
    %13 = vector.shape_cast %12 : vector<2x8x32xf32> to vector<16x32xf32>
    %c0_6 = arith.constant 0 : index
    %c0_7 = arith.constant 0 : index
    %14 = vector.load %arg4[%c0_6, %c0_7] : memref<32x128xf32, #tpu.memory_space<vmem>>, vector<32x128xf32>
    %cst = arith.constant dense<0.000000e+00> : vector<16x128xf32>
    %15 = tpu.matmul %13, %14, %cst {dimension_numbers = #tpu.dot_dimension_numbers<[1], [0], [0], [1], [0, 0, 1, 1], [], []>} : vector<16x32xf32>, vector<32x128xf32>, vector<16x128xf32> -> vector<16x128xf32>
    %16 = vector.shape_cast %15 : vector<16x128xf32> to vector<2x8x128xf32>
    %c0_8 = arith.constant 0 : index
    %c0_9 = arith.constant 0 : index
    %17 = vector.load %arg5[%c0_8, %c0_9] : memref<1x128xf32, #tpu.memory_space<vmem>>, vector<1x128xf32>
    %18 = vector.shape_cast %17 : vector<1x128xf32> to vector<1x1x128xf32>
    %19 = vector.broadcast %18 : vector<1x1x128xf32> to vector<2x8x128xf32>
    %20 = arith.addf %16, %19 : vector<2x8x128xf32>
    %c0_10 = arith.constant 0 : index
    %c0_11 = arith.constant 0 : index
    %c0_12 = arith.constant 0 : index
    %21 = vector.load %arg6[%c0_10, %c0_11, %c0_12] : memref<2x8x128xf32, #tpu.memory_space<vmem>>, vector<2x8x128xf32>
    tpu.vector_store %arg6[%c0_10, %c0_11, %c0_12], %20 {strides = array<i32>} : memref<2x8x128xf32, #tpu.memory_space<vmem>>, vector<2x8x128xf32>,
    return
  }
  func.func @transform_0(%arg0: i32) -> (i32, i32) {
    %c0_i32 = arith.constant 0 : i32
    %c0_i32_0 = arith.constant 0 : i32
    return %arg0, %c0_i32 : i32, i32
  }
  func.func @transform_1(%arg0: i32) -> (i32, i32, i32) {
    %c0_i32 = arith.constant 0 : i32
    %c0_i32_0 = arith.constant 0 : i32
    %c0_i32_1 = arith.constant 0 : i32
    return %arg0, %c0_i32, %c0_i32_0 : i32, i32, i32
  }
  func.func @transform_2(%arg0: i32) -> (i32, i32) {
    %c0_i32 = arith.constant 0 : i32
    %c0_i32_0 = arith.constant 0 : i32
    %c0_i32_1 = arith.constant 0 : i32
    return %c0_i32, %c0_i32_0 : i32, i32
  }
  func.func @transform_3(%arg0: i32) -> (i32, i32) {
    %c0_i32 = arith.constant 0 : i32
    %c0_i32_0 = arith.constant 0 : i32
    %c0_i32_1 = arith.constant 0 : i32
    return %c0_i32, %c0_i32_0 : i32, i32
  }
  func.func @transform_4(%arg0: i32) -> (i32, i32) {
    %c0_i32 = arith.constant 0 : i32
    %c0_i32_0 = arith.constant 0 : i32
    %c0_i32_1 = arith.constant 0 : i32
    return %c0_i32, %c0_i32_0 : i32, i32
  }
  func.func @transform_5(%arg0: i32) -> (i32, i32, i32) {
    %c0_i32 = arith.constant 0 : i32
    %c0_i32_0 = arith.constant 0 : i32
    %c0_i32_1 = arith.constant 0 : i32
    return %arg0, %c0_i32, %c0_i32_0 : i32, i32, i32
  }
}

</mosaic_0001>

<llo_original>
// kernel: tpu_custom_call.1
$region0: #{tpu_custom_call.1}
  #allocation0 [shape = 'u32[]', space=smem, size = 0x4, offset = 0x4, fixed_abs, tag = 'smem constant byte address 0x4 - core index']
  #allocation1 [shape = 'u32[144,128]{1,0:T(1,128)}', space=vmem, size = 0x12000, scoped, tag = 'internal scratch']
  %s0 = inlined_call_operand.vmem [shape: s32[2,1], index: 0, kind: input, shape index: {}]
  %s1 = inlined_call_operand.hbm [shape: f32[2,8,32], index: 1, kind: input, shape index: {}]
  %s2 = inlined_call_operand.hbm [shape: f32[8,32], index: 2, kind: input, shape index: {}]
  %s3 = inlined_call_operand.hbm [shape: f32[32,128], index: 3, kind: input, shape index: {}]
  %s4 = inlined_call_operand.vmem [shape: f32[1,128], index: 4, kind: input, shape index: {}]
  %s5 = inlined_call_operand.hbm [shape: f32[2,8,128], index: 5, kind: output, shape index: {}]
  %s6 = sld [smem:[#allocation0]]
  $region42: #{tpu_custom_call.1} parent=0
    _
  %s8 = ssub.s32 1, %s6
  %s9 = scalar_select 0, %s8, %s6
  $region1: #{tpu_custom_call.1} parent=0
    #allocation2 [shape = 'u8[8192]{0}', space=vmem, size = 0x2000, scoped, tag = 'input window, operand 1, single buffered']
    #allocation3 [shape = 's32[1]{0}', space=sflag, size = 0x4, scoped, tag = 'scoped memory for tpu_custom_call.1']
    #allocation4 [shape = 's32[1]{0}', space=sflag, size = 0x4, scoped, tag = 'scoped memory for tpu_custom_call.1']
    #allocation5 [shape = 'u8[4096]{0}', space=vmem, size = 0x1000, scoped, tag = 'input window, operand 2, single buffered']
    #allocation6 [shape = 's32[1]{0}', space=sflag, size = 0x4, scoped, tag = 'scoped memory for tpu_custom_call.1']
    #allocation7 [shape = 'u8[16384]{0}', space=vmem, size = 0x4000, scoped, tag = 'input window, operand 3, single buffered']
    #allocation8 [shape = 'u8[8192]{0}', space=vmem, size = 0x2000, scoped, tag = 'output window, operand 0, single buffered']
    %10 = vsyncpa [#allocation3], 0
    %11 = vsyncpa [#allocation6], 0
    %12 = vsyncpa [#allocation4], 0
    // Predicated region
    $region2: #{tpu_custom_call.1} parent=1 // pred_check
      _
    $region3: #{tpu_custom_call.1} parent=1 // pred_check_branch
      %14 = sbr.rel (0) target = $region5
    $region4: #{tpu_custom_call.1} parent=1 // pred_region
      _
    $region5: #{tpu_custom_call.1} parent=1 // pred_fallthru
      _
    // Predicated region
    $region6: #{tpu_custom_call.1} parent=1 // pred_check
      _
    $region7: #{tpu_custom_call.1} parent=1 // pred_check_branch
      %16 = sbr.rel (0) target = $region9
    $region8: #{tpu_custom_call.1} parent=1 // pred_region
      %s18 = ssub.s32 256, 256
      %19 = vsyncadd [#allocation3], %s18
      %s20 = sshll.u32 [#allocation2], 4
      %s21 = int_to_ptr.vmem [resolvable:$true] %s20
      %26 = dma.hbm_to_vmem [thread:$0]  %s1, 256, %s21, [#allocation3], 128, 128, 8
    $region9: #{tpu_custom_call.1} parent=1 // pred_fallthru
      _
    // Predicated region
    $region10: #{tpu_custom_call.1} parent=1 // pred_check
      _
    $region11: #{tpu_custom_call.1} parent=1 // pred_check_branch
      %28 = sbr.rel (0) target = $region13
    $region12: #{tpu_custom_call.1} parent=1 // pred_region
      %s30 = ssub.s32 128, 128
      %31 = vsyncadd [#allocation6], %s30
      %s33 = sshll.u32 [#allocation5], 4
      %s34 = int_to_ptr.vmem [resolvable:$true] %s33
      %36 = dma.hbm_to_vmem [thread:$0]  %s2, 128, %s34, [#allocation6]
    $region13: #{tpu_custom_call.1} parent=1 // pred_fallthru
      _
    // Predicated region
    $region14: #{tpu_custom_call.1} parent=1 // pred_check
      _
    $region15: #{tpu_custom_call.1} parent=1 // pred_check_branch
      %38 = sbr.rel (0) target = $region17
    $region16: #{tpu_custom_call.1} parent=1 // pred_region
      %s40 = ssub.s32 512, 512
      %41 = vsyncadd [#allocation6], %s40
      %s42 = sshll.u32 [#allocation7], 4
      %s43 = int_to_ptr.vmem [resolvable:$true] %s42
      %48 = dma.hbm_to_vmem [thread:$0]  %s3, 512, %s43, [#allocation6], 128, 128, 8
    $region17: #{tpu_custom_call.1} parent=1 // pred_fallthru
      _
    // Predicated region
    $region18: #{tpu_custom_call.1} parent=1 // pred_check
      _
    $region19: #{tpu_custom_call.1} parent=1 // pred_check_branch
      %50 = sbr.rel (0) target = $region21
    $region20: #{tpu_custom_call.1} parent=1 // pred_region
      _
    $region21: #{tpu_custom_call.1} parent=1 // pred_fallthru
      _
    // Predicated region
    $region22: #{tpu_custom_call.1} parent=1 // pred_check
      _
    $region23: #{tpu_custom_call.1} parent=1 // pred_check_branch
      %52 = sbr.rel (0) target = $region25
    $region24: #{tpu_custom_call.1} parent=1 // pred_region
      %53 = dma.done [#allocation3], 256
    $region25: #{tpu_custom_call.1} parent=1 // pred_fallthru
      _
    // Predicated region
    $region26: #{tpu_custom_call.1} parent=1 // pred_check
      _
    $region27: #{tpu_custom_call.1} parent=1 // pred_check_branch
      %55 = sbr.rel (0) target = $region29
    $region28: #{tpu_custom_call.1} parent=1 // pred_region
      %56 = dma.done [#allocation6], 128
    $region29: #{tpu_custom_call.1} parent=1 // pred_fallthru
      _
    // Predicated region
    $region30: #{tpu_custom_call.1} parent=1 // pred_check
      _
    $region31: #{tpu_custom_call.1} parent=1 // pred_check_branch
      %58 = sbr.rel (0) target = $region33
    $region32: #{tpu_custom_call.1} parent=1 // pred_region
      %59 = dma.done [#allocation6], 512
    $region33: #{tpu_custom_call.1} parent=1 // pred_fallthru
      _
    %v60 = vld [vmem:[#allocation2] sm:$0xff]
    %v61 = vld [vmem:[#allocation2 + $0x8] sm:$0xff]
    %v62 = vld [vmem:[%s0] sm:$0x3]
    %vm63 = vcmp.lt.s32.totalorder %v62, 8
    %v64 = vsel %vm63, %v62, 8
    %v65 = vlaneseq
    %v66 = vshrl.u32 %v65, 7
    %v68 = vunpack.c.l.s4 1966171168
    %v69 = vunpack.c.0.s8 %v68
    %v70 = vlaneseq
    %v71 = vshrl.u32 %v70, 7
    %v72 = vsub.s32 %v69, %v71
    %v73 = vrot.slane %v64, %v72
    %v74 = vcombine.high %v73, %v73
    %v76 = vunpack.c.l.s4 1966171168
    %v77 = vunpack.c.0.s8 %v76
    %v78 = vlaneseq
    %v79 = vshrl.u32 %v78, 7
    %v80 = vsub.s32 %v77, %v79
    %v81 = vrot.slane %v73, %v80
    %v83 = vunpack.c.l.s4 1966171168
    %v84 = vunpack.c.0.s8 %v83
    %v85 = vlaneseq
    %v86 = vshrl.u32 %v85, 7
    %v87 = vsub.s32 %v84, %v86
    %v88 = vrot.slane %v74, %v87
    %v89 = vlaneseq
    %v90 = vshrl.u32 %v89, 7
    %v91 = vsub.s32 0, %v90
    %v92 = vrot.slane %v81, %v91
    %v93 = vlaneseq
    %v94 = vshrl.u32 %v93, 7
    %v95 = vsub.s32 0, %v94
    %v96 = vrot.slane %v88, %v95
    %97 = vset.pattern.permute.xlu0 0
    %98 = vperm.xlu0 %97, %v92
    %v99 = vpop.permute.xlu0 %98
    %100 = vset.pattern.permute.xlu0 0
    %101 = vperm.xlu0 %100, %v96
    %v102 = vpop.permute.xlu0 %101
    %vm103 = vcmp.lt.s32.totalorder %v66, %v99
    %vm104 = vcmp.lt.s32.totalorder %v66, %v102
    %v105 = vld [vmem:[#allocation5] sm:$0xff]
    %v106 = vsel %vm103, %v60, %v105
    %v107 = vsel %vm104, %v61, %v105
    %v108 = vld [vmem:[#allocation7] sm:$0xff]
    %v109 = vld [vmem:[#allocation7 + $0x8] sm:$0xff]
    %v110 = vld [vmem:[#allocation7 + $0x10] sm:$0xff]
    %v111 = vld [vmem:[#allocation7 + $0x18] sm:$0xff]
    %vm112 = vcmask 261120
    %v114 = vsel %vm112, %v106, 0
    %v117 = vsel %vm112, %v107, 0
    %119 = vmatprep.subr.mxu0 0.0
    %120 = vmatpush1.msra.mxu0 0.0
    %121 = vmatprep.subr.mxu0 0.0
    %122 = vmatpush1.msra.mxu0 0.0
    %123 = vmatprep.subr.mxu0 0.0
    %124 = vmatpush1.msra.mxu0 0.0
    %125 = vmatprep.subr.mxu0 0.0
    %126 = vmatpush1.msra.mxu0 0.0
    %127 = vmatprep.subr.mxu0 0.0
    %128 = vmatpush1.msra.mxu0 0.0
    %129 = vmatprep.subr.mxu0 0.0
    %130 = vmatpush1.msra.mxu0 0.0
    %131 = vmatprep.subr.mxu0 0.0
    %132 = vmatpush1.msra.mxu0 0.0
    %133 = vmatprep.subr.mxu0 0.0
    %134 = vmatpush1.msra.mxu0 0.0
    %135 = vmatprep.subr.mxu0 0.0
    %136 = vmatpush1.msra.mxu0 0.0
    %137 = vmatprep.subr.mxu0 0.0
    %138 = vmatpush1.msra.mxu0 0.0
    %139 = vmatprep.subr.mxu0 0.0
    %140 = vmatpush1.msra.mxu0 0.0
    %141 = vmatprep.subr.mxu0 0.0
    %142 = vmatpush1.msra.mxu0 0.0
    %143 = vmatprep.subr.mxu0 0.0
    %144 = vmatpush1.msra.mxu0 %v111
    %145 = vmatprep.subr.mxu0 0.0
    %146 = vmatpush1.msra.mxu0 %v110
    %147 = vmatprep.subr.mxu0 0.0
    %148 = vmatpush1.msra.mxu0 %v109
    %149 = vmatprep.subr.mxu0 0.0
    %150 = vmatpush1.msra.mxu0 %v108
    %151 = vmatprep.subr.mxu0 0.0
    %152 = vmatpush2.msra.mxu0 0.0
    %153 = vmatprep.subr.mxu0 0.0
    %154 = vmatpush2.msra.mxu0 0.0
    %155 = vmatprep.subr.mxu0 0.0
    %156 = vmatpush2.msra.mxu0 0.0
    %157 = vmatprep.subr.mxu0 0.0
    %158 = vmatpush2.msra.mxu0 0.0
    %159 = vmatprep.subr.mxu0 0.0
    %160 = vmatpush2.msra.mxu0 0.0
    %161 = vmatprep.subr.mxu0 0.0
    %162 = vmatpush2.msra.mxu0 0.0
    %163 = vmatprep.subr.mxu0 0.0
    %164 = vmatpush2.msra.mxu0 0.0
    %165 = vmatprep.subr.mxu0 0.0
    %166 = vmatpush2.msra.mxu0 0.0
    %167 = vmatprep.subr.mxu0 0.0
    %168 = vmatpush2.msra.mxu0 0.0
    %169 = vmatprep.subr.mxu0 0.0
    %170 = vmatpush2.msra.mxu0 0.0
    %171 = vmatprep.subr.mxu0 0.0
    %172 = vmatpush2.msra.mxu0 0.0
    %173 = vmatprep.subr.mxu0 0.0
    %174 = vmatpush2.msra.mxu0 0.0
    %175 = vmatprep.subr.mxu0 0.0
    %176 = vmatpush2.msra.mxu0 0.0
    %177 = vmatprep.subr.mxu0 0.0
    %178 = vmatpush2.msra.mxu0 0.0
    %179 = vmatprep.subr.mxu0 0.0
    %180 = vmatpush2.msra.mxu0 0.0
    %181 = vmatprep.subr.mxu0 0.0
    %182 = vmatpush2.msra.mxu0 0.0
    %183 = vmatprep.mubr.f32.mxu0 0.0
    %184 = vmatmul.mubr.f32.gmra.mxu0 %v114
    %v185 = vpop.f32.mrf.mxu0
    %v186 = vadd.f32 0.0, %v185
    %v187 = vpop.f32.mrf.mxu0
    %188 = vmatprep.mubr.f32.mxu0 0.0
    %189 = vmatmul.mubr.f32.gmra.mxu0 %v117
    %v190 = vpop.f32.mrf.mxu0
    %v191 = vadd.f32 0.0, %v190
    %v192 = vpop.f32.mrf.mxu0
    %193 = vdwg.mxu0
    %v194 = vld [vmem:[%s4] sm:$0x1]
    %v196 = vlaneseq
    %v197 = vshrl.u32 %v196, 7
    %v198 = vsub.s32 0, %v197
    %v199 = vrot.slane %v194, %v198
    %v201 = vadd.f32 %v186, %v199
    %v202 = vadd.f32 %v191, %v199
    %203 = vst [vmem:[#allocation8] sm:$0xff] %v201
    %204 = vst [vmem:[#allocation8 + $0x8] sm:$0xff] %v202
    // Predicated region
    $region34: #{tpu_custom_call.1} parent=1 // pred_check
      _
    $region35: #{tpu_custom_call.1} parent=1 // pred_check_branch
      %206 = sbr.rel (0) target = $region37
    $region36: #{tpu_custom_call.1} parent=1 // pred_region
      %s208 = ssub.s32 256, 256
      %209 = vsyncadd [#allocation4], %s208
      %s210 = sshll.u32 [#allocation8], 4
      %s211 = int_to_ptr.vmem [resolvable:$true] %s210
      %216 = dma.vmem_to_hbm [thread:$0]  %s211, 256, %s5, [#allocation4], 128, 128, 8
    $region37: #{tpu_custom_call.1} parent=1 // pred_fallthru
      _
    // Predicated region
    $region38: #{tpu_custom_call.1} parent=1 // pred_check
      _
    $region39: #{tpu_custom_call.1} parent=1 // pred_check_branch
      %218 = sbr.rel (0) target = $region41
    $region40: #{tpu_custom_call.1} parent=1 // pred_region
      %219 = dma.done [#allocation4], 256
    $region41: #{tpu_custom_call.1} parent=1 // pred_fallthru
      _
    %220 = vsyncpa [#allocation3], 1
    %221 = vsyncpa [#allocation6], 1
    %222 = vsyncpa [#allocation4], 1

</llo_original>
